<compile_context>
chip_gen: v5e
topology: v5e:2x2
jax: 0.10.0
libtpu: 0.0.40
codegen_flags: <defaults>
</compile_context>

<pallas_src>
import functools

import jax
import jax.numpy as jnp
from jax.experimental import pallas as pl
from jax.experimental.pallas import tpu as pltpu


def _round_up(v, m):
    return (v + m - 1) // m * m


def chebynet_kernel(L_ref, x_ref, w_ref, o_ref, px_ref, *, bf16_matmul):
    """Grid = (K,).  k is the (sequential, 'arbitrary') Chebyshev-order axis.

    L_ref : (N, N)       graph Laplacian (padded)
    x_ref : (B, N, Fi)   input features (padded)
    w_ref : (Fi, Fo)     weight of the k-th GraphConvolution (leading K dim squeezed)
    o_ref : (B, N, Fo)   output block, resident across k (block index ignores k)
    px_ref: (B, N, Fi)   f32 scratch carrying px_k = L^k @ x across k
    """
    k = pl.program_id(0)
    K = pl.num_programs(0)
    B = x_ref.shape[0]

    mm_dtype = jnp.bfloat16 if bf16_matmul else jnp.float32

    @pl.when(k == 0)
    def _():
        # adj[0] = I  =>  px_0 = x ; zero the resident output/accumulator.
        px_ref[...] = x_ref[...].astype(jnp.float32)
        o_ref[...] = jnp.zeros_like(o_ref)

    @pl.when(k > 0)
    def _():
        # adj[k] @ x = L @ (adj[k-1] @ x)   (powers of the same L commute)
        Lmat = L_ref[...].astype(mm_dtype)
        for b in range(B):  # B is small & static -> unrolled plain 2-D matmuls
            px_ref[b] = jnp.dot(Lmat, px_ref[b].astype(mm_dtype),
                                preferred_element_type=jnp.float32)

    # GraphConvolution k: accumulate (L^k @ x_b) @ W_k into the output block.
    Wk = w_ref[...].astype(mm_dtype)
    for b in range(B):
        term = jnp.dot(px_ref[b].astype(mm_dtype), Wk,
                       preferred_element_type=jnp.float32)
        o_ref[b] = o_ref[b] + term.astype(o_ref.dtype)

    @pl.when(k == K - 1)
    def _():
        # F.relu on the summed result (padded rows/cols are zero and stay zero).
        o_ref[...] = jnp.maximum(o_ref[...], 0.0)


def chebynet_forward(x, L, W, *, bf16_matmul=True):
    """x: (B, N, Fin), L: (N, N), W: (K, Fin, Fout) -> relu(sum_k (L^k @ x) @ W_k)."""
    B, N, Fin = x.shape
    K, _, Fout = W.shape
    assert K >= 1 and B >= 1

    # Pad to TPU-friendly shapes: sublane multiple (8) for N, lane multiple (128)
    # for the feature dims -> unmasked vector stores and full-lane MXU feeds.
    Np = _round_up(N, 8)
    Fi = _round_up(Fin, 128)
    Fo = _round_up(Fout, 128)

    x_p = jnp.pad(x, ((0, 0), (0, Np - N), (0, Fi - Fin)))
    L_p = jnp.pad(L, ((0, Np - N), (0, Np - N)))
    W_p = jnp.pad(W, ((0, 0), (0, Fi - Fin), (0, Fo - Fout)))

    kernel = functools.partial(chebynet_kernel, bf16_matmul=bf16_matmul)

    out = pl.pallas_call(
        kernel,
        out_shape=jax.ShapeDtypeStruct((B, Np, Fo), x.dtype),
        grid_spec=pltpu.PrefetchScalarGridSpec(
            num_scalar_prefetch=0,
            grid=(K,),  # sequential Chebyshev-recurrence axis
            in_specs=[
                pl.BlockSpec((Np, Np), lambda k: (0, 0)),           # L (fetched once)
                pl.BlockSpec((B, Np, Fi), lambda k: (0, 0, 0)),     # x (fetched once)
                pl.BlockSpec((None, Fi, Fo), lambda k: (k, 0, 0)),  # W_k (K dim squeezed)
            ],
            out_specs=pl.BlockSpec((B, Np, Fo), lambda k: (0, 0, 0)),
            scratch_shapes=[pltpu.VMEM((B, Np, Fi), jnp.float32)],  # px recurrence carry
        ),
        # k carries a recurrence (px_ref) and an accumulation (o_ref), so it must
        # stay sequential ("arbitrary"); do NOT split/reorder it as "parallel".
        # For large N (and on v7x's 2 TCs / 64 MiB VMEM) add a row-tiled N axis
        # marked "parallel" and set vmem_limit_bytes explicitly.
        compiler_params=pltpu.CompilerParams(
            dimension_semantics=("arbitrary",)),
    )(L_p, x_p, W_p)

    # Slice off the padding.
    return out[:, :N, :Fout]


def chebynet_ref(x, L, W):
    """Pure-JAX reference mirroring the PyTorch forward."""
    K = W.shape[0]
    N = L.shape[0]
    adj = [jnp.eye(N, dtype=L.dtype)]
    if K > 1:
        adj.append(L)
    for _ in range(2, K):
        adj.append(adj[-1] @ L)
    out = None
    for k in range(K):
        term = (adj[k] @ x) @ W[k]
        out = term if out is None else out + term
    return jax.nn.relu(out)


if __name__ == "__main__":
    # Small shapes consistent with Chebynet(xdim=(B, N, Fin), K, num_out, dropout)
    B, N, Fin, Fout, K = 2, 16, 8, 32, 3

    key = jax.random.PRNGKey(0)
    kx, kl, kw = jax.random.split(key, 3)

    x = jax.random.normal(kx, (B, N, Fin), dtype=jnp.float32)
    L = jax.random.normal(kl, (N, N), dtype=jnp.float32) / jnp.sqrt(N)

    # Deterministic xavier_normal_-style init for each GraphConvolution weight.
    std = (2.0 / (Fin + Fout)) ** 0.5
    W = std * jax.random.normal(kw, (K, Fin, Fout), dtype=jnp.float32)

    ref = chebynet_ref(x, L, W)

    # Exact (f32 operands) path.
    out_f32 = jax.block_until_ready(chebynet_forward(x, L, W, bf16_matmul=False))
    assert out_f32.shape == (B, N, Fout)
    assert jnp.allclose(out_f32, ref, atol=1e-4, rtol=1e-4), \
        f"f32 max abs err = {float(jnp.max(jnp.abs(out_f32 - ref)))}"

    # Fast path: bf16 MXU operands, f32 accumulation (looser tolerance).
    out_bf16 = jax.block_until_ready(chebynet_forward(x, L, W, bf16_matmul=True))
    assert out_bf16.shape == (B, N, Fout)
    assert jnp.allclose(out_bf16, ref, atol=5e-2, rtol=5e-2), \
        f"bf16 max abs err = {float(jnp.max(jnp.abs(out_bf16 - ref)))}"

    print("KERNEL_OK")
</pallas_src>

<mosaic_0001>
module attributes {stable_mosaic.version = 11 : i64} {
  func.func @chebynet_kernel(%arg0: i32, %arg1: memref<16x16xf32, #tpu.memory_space<vmem>>, %arg2: memref<2x16x128xf32, #tpu.memory_space<vmem>>, %arg3: memref<1x128x128xf32, #tpu.memory_space<vmem>>, %arg4: memref<2x16x128xf32, #tpu.memory_space<vmem>>, %arg5: memref<2x16x128xf32, #tpu.memory_space<vmem>>) attributes {dimension_semantics = [#tpu.dimension_semantics<arbitrary>], iteration_bounds = array<i64: 3>, scalar_prefetch = 0 : i64, scratch_operands = 1 : i64, tpu.core_type = #tpu.core_type<tc>, window_params = [{pipeline_mode = #tpu.pipeline_mode<synchronous>, transform_indices = @transform_0, window_bounds = array<i64: 16, 16>}, {pipeline_mode = #tpu.pipeline_mode<synchronous>, transform_indices = @transform_1, window_bounds = array<i64: 2, 16, 128>}, {transform_indices = @transform_2, window_bounds = array<i64: 1, 128, 128>}, {pipeline_mode = #tpu.pipeline_mode<synchronous>, transform_indices = @transform_3, window_bounds = array<i64: 2, 16, 128>}]} {
    %c0_i32 = arith.constant 0 : i32
    %0 = arith.cmpi eq, %arg0, %c0_i32 : i32
    %1 = arith.extui %0 : i1 to i32
    %c0_i32_0 = arith.constant 0 : i32
    %2 = arith.cmpi ne, %1, %c0_i32_0 : i32
    scf.if %2 {
      %c0_24 = arith.constant 0 : index
      %c0_25 = arith.constant 0 : index
      %c0_26 = arith.constant 0 : index
      %29 = vector.load %arg2[%c0_24, %c0_25, %c0_26] : memref<2x16x128xf32, #tpu.memory_space<vmem>>, vector<2x16x128xf32>
      %c0_27 = arith.constant 0 : index
      %c0_28 = arith.constant 0 : index
      %c0_29 = arith.constant 0 : index
      %30 = vector.load %arg5[%c0_27, %c0_28, %c0_29] : memref<2x16x128xf32, #tpu.memory_space<vmem>>, vector<2x16x128xf32>
      tpu.vector_store %arg5[%c0_27, %c0_28, %c0_29], %29 {strides = array<i32>} : memref<2x16x128xf32, #tpu.memory_space<vmem>>, vector<2x16x128xf32>,
      %cst_30 = arith.constant 0.000000e+00 : f32
      %31 = vector.broadcast %cst_30 : f32 to vector<2x16x128xf32>
      %c0_31 = arith.constant 0 : index
      %c0_32 = arith.constant 0 : index
      %c0_33 = arith.constant 0 : index
      %32 = vector.load %arg4[%c0_31, %c0_32, %c0_33] : memref<2x16x128xf32, #tpu.memory_space<vmem>>, vector<2x16x128xf32>
      tpu.vector_store %arg4[%c0_31, %c0_32, %c0_33], %31 {strides = array<i32>} : memref<2x16x128xf32, #tpu.memory_space<vmem>>, vector<2x16x128xf32>,
    } else {
    }
    %c0_i32_1 = arith.constant 0 : i32
    %3 = arith.cmpi sgt, %arg0, %c0_i32_1 : i32
    %4 = arith.extui %3 : i1 to i32
    %c0_i32_2 = arith.constant 0 : i32
    %5 = arith.cmpi ne, %4, %c0_i32_2 : i32
    scf.if %5 {
      %c0_24 = arith.constant 0 : index
      %c0_25 = arith.constant 0 : index
      %29 = vector.load %arg1[%c0_24, %c0_25] : memref<16x16xf32, #tpu.memory_space<vmem>>, vector<16x16xf32>
      %c0_26 = arith.constant 0 : index
      %c0_27 = arith.constant 0 : index
      %c0_28 = arith.constant 0 : index
      %30 = vector.load %arg5[%c0_26, %c0_27, %c0_28] : memref<2x16x128xf32, #tpu.memory_space<vmem>>, vector<1x16x128xf32>
      %31 = vector.shape_cast %30 : vector<1x16x128xf32> to vector<16x128xf32>
      %cst_29 = arith.constant dense<0.000000e+00> : vector<16x128xf32>
      %32 = tpu.matmul %29, %31, %cst_29 {dimension_numbers = #tpu.dot_dimension_numbers<[1], [0], [0], [1], [0, 0, 1, 1], [], []>} : vector<16x16xf32>, vector<16x128xf32>, vector<16x128xf32> -> vector<16x128xf32>
      %c0_30 = arith.constant 0 : index
      %c0_31 = arith.constant 0 : index
      %c0_32 = arith.constant 0 : index
      %33 = vector.load %arg5[%c0_30, %c0_31, %c0_32] : memref<2x16x128xf32, #tpu.memory_space<vmem>>, vector<1x16x128xf32>
      %34 = vector.shape_cast %33 : vector<1x16x128xf32> to vector<16x128xf32>
      %35 = vector.shape_cast %32 : vector<16x128xf32> to vector<1x16x128xf32>
      tpu.vector_store %arg5[%c0_30, %c0_31, %c0_32], %35 {strides = array<i32>} : memref<2x16x128xf32, #tpu.memory_space<vmem>>, vector<1x16x128xf32>,
      %c1_33 = arith.constant 1 : index
      %c0_34 = arith.constant 0 : index
      %c0_35 = arith.constant 0 : index
      %36 = vector.load %arg5[%c1_33, %c0_34, %c0_35] : memref<2x16x128xf32, #tpu.memory_space<vmem>>, vector<1x16x128xf32>
      %37 = vector.shape_cast %36 : vector<1x16x128xf32> to vector<16x128xf32>
      %cst_36 = arith.constant dense<0.000000e+00> : vector<16x128xf32>
      %38 = tpu.matmul %29, %37, %cst_36 {dimension_numbers = #tpu.dot_dimension_numbers<[1], [0], [0], [1], [0, 0, 1, 1], [], []>} : vector<16x16xf32>, vector<16x128xf32>, vector<16x128xf32> -> vector<16x128xf32>
      %c1_37 = arith.constant 1 : index
      %c0_38 = arith.constant 0 : index
      %c0_39 = arith.constant 0 : index
      %39 = vector.load %arg5[%c1_37, %c0_38, %c0_39] : memref<2x16x128xf32, #tpu.memory_space<vmem>>, vector<1x16x128xf32>
      %40 = vector.shape_cast %39 : vector<1x16x128xf32> to vector<16x128xf32>
      %41 = vector.shape_cast %38 : vector<16x128xf32> to vector<1x16x128xf32>
      tpu.vector_store %arg5[%c1_37, %c0_38, %c0_39], %41 {strides = array<i32>} : memref<2x16x128xf32, #tpu.memory_space<vmem>>, vector<1x16x128xf32>,
    } else {
    }
    %c0 = arith.constant 0 : index
    %c0_3 = arith.constant 0 : index
    %c0_4 = arith.constant 0 : index
    %6 = vector.load %arg3[%c0, %c0_3, %c0_4] : memref<1x128x128xf32, #tpu.memory_space<vmem>>, vector<1x128x128xf32>
    %7 = vector.shape_cast %6 : vector<1x128x128xf32> to vector<128x128xf32>
    %c0_5 = arith.constant 0 : index
    %c0_6 = arith.constant 0 : index
    %c0_7 = arith.constant 0 : index
    %8 = vector.load %arg5[%c0_5, %c0_6, %c0_7] : memref<2x16x128xf32, #tpu.memory_space<vmem>>, vector<1x16x128xf32>
    %9 = vector.shape_cast %8 : vector<1x16x128xf32> to vector<16x128xf32>
    %cst = arith.constant dense<0.000000e+00> : vector<16x128xf32>
    %10 = tpu.matmul %9, %7, %cst {dimension_numbers = #tpu.dot_dimension_numbers<[1], [0], [0], [1], [0, 0, 1, 1], [], []>} : vector<16x128xf32>, vector<128x128xf32>, vector<16x128xf32> -> vector<16x128xf32>
    %c0_8 = arith.constant 0 : index
    %c0_9 = arith.constant 0 : index
    %c0_10 = arith.constant 0 : index
    %11 = vector.load %arg4[%c0_8, %c0_9, %c0_10] : memref<2x16x128xf32, #tpu.memory_space<vmem>>, vector<1x16x128xf32>
    %12 = vector.shape_cast %11 : vector<1x16x128xf32> to vector<16x128xf32>
    %13 = arith.addf %12, %10 : vector<16x128xf32>
    %c0_11 = arith.constant 0 : index
    %c0_12 = arith.constant 0 : index
    %c0_13 = arith.constant 0 : index
    %14 = vector.load %arg4[%c0_11, %c0_12, %c0_13] : memref<2x16x128xf32, #tpu.memory_space<vmem>>, vector<1x16x128xf32>
    %15 = vector.shape_cast %14 : vector<1x16x128xf32> to vector<16x128xf32>
    %16 = vector.shape_cast %13 : vector<16x128xf32> to vector<1x16x128xf32>
    tpu.vector_store %arg4[%c0_11, %c0_12, %c0_13], %16 {strides = array<i32>} : memref<2x16x128xf32, #tpu.memory_space<vmem>>, vector<1x16x128xf32>,
    %c1 = arith.constant 1 : index
    %c0_14 = arith.constant 0 : index
    %c0_15 = arith.constant 0 : index
    %17 = vector.load %arg5[%c1, %c0_14, %c0_15] : memref<2x16x128xf32, #tpu.memory_space<vmem>>, vector<1x16x128xf32>
    %18 = vector.shape_cast %17 : vector<1x16x128xf32> to vector<16x128xf32>
    %cst_16 = arith.constant dense<0.000000e+00> : vector<16x128xf32>
    %19 = tpu.matmul %18, %7, %cst_16 {dimension_numbers = #tpu.dot_dimension_numbers<[1], [0], [0], [1], [0, 0, 1, 1], [], []>} : vector<16x128xf32>, vector<128x128xf32>, vector<16x128xf32> -> vector<16x128xf32>
    %c1_17 = arith.constant 1 : index
    %c0_18 = arith.constant 0 : index
    %c0_19 = arith.constant 0 : index
    %20 = vector.load %arg4[%c1_17, %c0_18, %c0_19] : memref<2x16x128xf32, #tpu.memory_space<vmem>>, vector<1x16x128xf32>
    %21 = vector.shape_cast %20 : vector<1x16x128xf32> to vector<16x128xf32>
    %22 = arith.addf %21, %19 : vector<16x128xf32>
    %c1_20 = arith.constant 1 : index
    %c0_21 = arith.constant 0 : index
    %c0_22 = arith.constant 0 : index
    %23 = vector.load %arg4[%c1_20, %c0_21, %c0_22] : memref<2x16x128xf32, #tpu.memory_space<vmem>>, vector<1x16x128xf32>
    %24 = vector.shape_cast %23 : vector<1x16x128xf32> to vector<16x128xf32>
    %25 = vector.shape_cast %22 : vector<16x128xf32> to vector<1x16x128xf32>
    tpu.vector_store %arg4[%c1_20, %c0_21, %c0_22], %25 {strides = array<i32>} : memref<2x16x128xf32, #tpu.memory_space<vmem>>, vector<1x16x128xf32>,
    %c2_i32 = arith.constant 2 : i32
    %26 = arith.cmpi eq, %arg0, %c2_i32 : i32
    %27 = arith.extui %26 : i1 to i32
    %c0_i32_23 = arith.constant 0 : i32
    %28 = arith.cmpi ne, %27, %c0_i32_23 : i32
    scf.if %28 {
      %c0_24 = arith.constant 0 : index
      %c0_25 = arith.constant 0 : index
      %c0_26 = arith.constant 0 : index
      %29 = vector.load %arg4[%c0_24, %c0_25, %c0_26] : memref<2x16x128xf32, #tpu.memory_space<vmem>>, vector<2x16x128xf32>
      %cst_27 = arith.constant 0.000000e+00 : f32
      %30 = vector.broadcast %cst_27 : f32 to vector<2x16x128xf32>
      %31 = arith.maximumf %29, %30 : vector<2x16x128xf32>
      %c0_28 = arith.constant 0 : index
      %c0_29 = arith.constant 0 : index
      %c0_30 = arith.constant 0 : index
      %32 = vector.load %arg4[%c0_28, %c0_29, %c0_30] : memref<2x16x128xf32, #tpu.memory_space<vmem>>, vector<2x16x128xf32>
      tpu.vector_store %arg4[%c0_28, %c0_29, %c0_30], %31 {strides = array<i32>} : memref<2x16x128xf32, #tpu.memory_space<vmem>>, vector<2x16x128xf32>,
    } else {
    }
    return
  }
  func.func @transform_0(%arg0: i32) -> (i32, i32) {
    %c0_i32 = arith.constant 0 : i32
    %c0_i32_0 = arith.constant 0 : i32
    %c0_i32_1 = arith.constant 0 : i32
    return %c0_i32, %c0_i32_0 : i32, i32
  }
  func.func @transform_1(%arg0: i32) -> (i32, i32, i32) {
    %c0_i32 = arith.constant 0 : i32
    %c0_i32_0 = arith.constant 0 : i32
    %c0_i32_1 = arith.constant 0 : i32
    %c0_i32_2 = arith.constant 0 : i32
    return %c0_i32, %c0_i32_0, %c0_i32_1 : i32, i32, i32
  }
  func.func @transform_2(%arg0: i32) -> (i32, i32, i32) {
    %c0_i32 = arith.constant 0 : i32
    %c0_i32_0 = arith.constant 0 : i32
    %c0_i32_1 = arith.constant 0 : i32
    return %arg0, %c0_i32, %c0_i32_0 : i32, i32, i32
  }
  func.func @transform_3(%arg0: i32) -> (i32, i32, i32) {
    %c0_i32 = arith.constant 0 : i32
    %c0_i32_0 = arith.constant 0 : i32
    %c0_i32_1 = arith.constant 0 : i32
    %c0_i32_2 = arith.constant 0 : i32
    return %c0_i32, %c0_i32_0, %c0_i32_1 : i32, i32, i32
  }
}

</mosaic_0001>

<llo_original>
// kernel: tpu_custom_call.1
$region0: #{tpu_custom_call.1}
  #allocation0 [shape = 'u32[]', space=smem, size = 0x4, offset = 0x4, fixed_abs, tag = 'smem constant byte address 0x4 - core index']
  #allocation1 [shape = 'u32[72,128]{1,0:T(1,128)}', space=vmem, size = 0x9000, scoped, tag = 'internal scratch']
  #allocation2 [shape = 'f32[2,16,128]{2,1,0:T(8,128)}', space=vmem, size = 0x4000, scoped, tag = 'scratch operand']
  %s0 = inlined_call_operand.hbm [shape: f32[16,16], index: 0, kind: input, shape index: {}]
  %s1 = inlined_call_operand.hbm [shape: f32[2,16,128], index: 1, kind: input, shape index: {}]
  %s2 = inlined_call_operand.hbm [shape: f32[3,128,128], index: 2, kind: input, shape index: {}]
  %s3 = inlined_call_operand.hbm [shape: f32[2,16,128], index: 3, kind: output, shape index: {}]
  %s4 = sld [smem:[#allocation0]]
  $region69: #{tpu_custom_call.1} parent=0
    _
  %s6 = ssub.s32 1, %s4
  %s7 = scalar_select 0, %s6, %s4
  $region1: #{tpu_custom_call.1} parent=0
    #allocation3 [shape = 'u8[8192]{0}', space=vmem, size = 0x2000, scoped, tag = 'input window, operand 0, single buffered']
    #allocation4 [shape = 's32[2]{0}', space=sflag, size = 0x8, scoped, tag = 'scoped memory for tpu_custom_call.1']
    #allocation5 [shape = 's32[2]{0}', space=sflag, size = 0x8, scoped, tag = 'scoped memory for tpu_custom_call.1']
    #allocation6 [shape = 'u8[16384]{0}', space=vmem, size = 0x4000, scoped, tag = 'input window, operand 1, single buffered']
    #allocation7 [shape = 's32[1]{0}', space=sflag, size = 0x4, scoped, tag = 'scoped memory for tpu_custom_call.1']
    #allocation8 [shape = 'u8[131072]{0}', space=vmem, size = 0x20000, scoped, tag = 'input window, operand 2']
    #allocation9 [shape = 'u8[16384]{0}', space=vmem, size = 0x4000, scoped, tag = 'output window, operand 0, single buffered']
    %8 = vsyncpa [#allocation4], 0
    %9 = vsyncpa [#allocation7], 0
    %10 = vsyncpa [#allocation5], 0
    loop: start=0, step=1, limit=5
    $region2: #{tpu_custom_call.1} parent=1 // loop_pre_header
      _
    $region3: #{tpu_custom_call.1} parent=1 // loop_header
      %s12 = sphi 0, %s16
      %p13 = scmp.ge.s32.totalorder %s12, 5
      %s20 = sphi 0, %s20
      %s22 = sphi 0, %s20
      %s23 = sphi 0, %s22
      %s37 = sphi 0, %s23
      %s41 = sphi 0, %s41
      %s43 = sphi 0, %s41
      %s44 = sphi 0, %s43
      %s58 = sphi 0, %s44
      %s64 = sphi 0, %s66
      %s67 = sphi 0, %s64
      %s68 = sphi 0, %s67
      %s84 = sphi 0, %s68
      %s88 = sphi 0, %s88
      %s90 = sphi 0, %s88
      %s91 = sphi 0, %s90
      %s105 = sphi 0, %s91
    $region4: #{tpu_custom_call.1} parent=1 // loop_header_branch
      %15 = sbr.rel (%p13) target = $region8
    $region5: #{tpu_custom_call.1} parent=1 // loop_body
      %s17 = ssub.s32 %s12, 1
      %s18 = ssub.s32 %s12, 2
      %s19 = sadd.s32 %s12, 1
      %s21 = sadd.s32 %s20, 1
      %p24 = scmp.eq.s32.totalorder %s12, 2
      %p25 = scmp.ne.s32.totalorder %s20, %s22
      %p26 = scmp.eq.s32.totalorder %s12, 0
      %p27 = por %p25, %p26
      %p28 = scmp.ne.s32.totalorder %s20, %s22
      %p29 = scmp.eq.s32.totalorder %s17, 2
      %p30 = por %p28, %p29
      %p31 = scmp.ne.s32.totalorder %s22, %s23
      %p32 = scmp.eq.s32.totalorder %s17, 0
      %p33 = por %p31, %p32
      %p34 = scmp.ne.s32.totalorder %s22, %s23
      %p35 = scmp.eq.s32.totalorder %s18, 2
      %p36 = por %p34, %p35
      %p38 = scmp.ne.s32.totalorder %s23, %s37
      %p39 = scmp.eq.s32.totalorder %s18, 0
      %p40 = por %p38, %p39
      %s42 = sadd.s32 %s41, 1
      %p45 = scmp.eq.s32.totalorder %s12, 2
      %p46 = scmp.ne.s32.totalorder %s41, %s43
      %p47 = scmp.eq.s32.totalorder %s12, 0
      %p48 = por %p46, %p47
      %p49 = scmp.ne.s32.totalorder %s41, %s43
      %p50 = scmp.eq.s32.totalorder %s17, 2
      %p51 = por %p49, %p50
      %p52 = scmp.ne.s32.totalorder %s43, %s44
      %p53 = scmp.eq.s32.totalorder %s17, 0
      %p54 = por %p52, %p53
      %p55 = scmp.ne.s32.totalorder %s43, %s44
      %p56 = scmp.eq.s32.totalorder %s18, 2
      %p57 = por %p55, %p56
      %p59 = scmp.ne.s32.totalorder %s44, %s58
      %p60 = scmp.eq.s32.totalorder %s18, 0
      %p61 = por %p59, %p60
      %s62 = ssub.s32 %s12, %s19
      %p63 = scmp.eq.s32.totalorder %s62, 0
      %s65 = sadd.s32 %s64, 1
      %s66 = scalar_select %p63, %s64, %s65
      %p69 = pneg %p63
      %p70 = scmp.eq.s32.totalorder %s12, 2
      %p71 = por %p69, %p70
      %p72 = scmp.ne.s32.totalorder %s64, %s67
      %p73 = scmp.eq.s32.totalorder %s12, 0
      %p74 = por %p72, %p73
      %p75 = scmp.ne.s32.totalorder %s64, %s67
      %p76 = scmp.eq.s32.totalorder %s17, 2
      %p77 = por %p75, %p76
      %p78 = scmp.ne.s32.totalorder %s67, %s68
      %p79 = scmp.eq.s32.totalorder %s17, 0
      %p80 = por %p78, %p79
      %p81 = scmp.ne.s32.totalorder %s67, %s68
      %p82 = scmp.eq.s32.totalorder %s18, 2
      %p83 = por %p81, %p82
      %p85 = scmp.ne.s32.totalorder %s68, %s84
      %p86 = scmp.eq.s32.totalorder %s18, 0
      %p87 = por %p85, %p86
      %s89 = sadd.s32 %s88, 1
      %p92 = scmp.eq.s32.totalorder %s12, 2
      %p93 = scmp.ne.s32.totalorder %s88, %s90
      %p94 = scmp.eq.s32.totalorder %s12, 0
      %p95 = por %p93, %p94
      %p96 = scmp.ne.s32.totalorder %s88, %s90
      %p97 = scmp.eq.s32.totalorder %s17, 2
      %p98 = por %p96, %p97
      %p99 = scmp.ne.s32.totalorder %s90, %s91
      %p100 = scmp.eq.s32.totalorder %s17, 0
      %p101 = por %p99, %p100
      %p102 = scmp.ne.s32.totalorder %s90, %s91
      %p103 = scmp.eq.s32.totalorder %s18, 2
      %p104 = por %p102, %p103
      %p106 = scmp.ne.s32.totalorder %s91, %s105
      %p107 = scmp.eq.s32.totalorder %s18, 0
      %p108 = por %p106, %p107
      %p109 = scmp.le.s32.totalorder 1, %s12
      %p110 = scmp.lt.s32.totalorder %s12, 4
      %p111 = pnand %p109, %p110
      %p112 = pneg %p111
      // Predicated region
      $region9: #{tpu_custom_call.1} parent=5 // pred_check
        _
      $region10: #{tpu_custom_call.1} parent=5 // pred_check_branch
        %114 = sbr.rel (%p111) target = $region12
      $region11: #{tpu_custom_call.1} parent=5 // pred_region
        %s115 = ssub.s32 %s12, 1
        // Predicated region
        $region13: #{tpu_custom_call.1} parent=11 // pred_check
          %p116 = pneg %p33
        $region14: #{tpu_custom_call.1} parent=11 // pred_check_branch
          %118 = sbr.rel (%p116) target = $region16
        $region15: #{tpu_custom_call.1} parent=11 // pred_region
          %120 = vsyncadd [#allocation4], 0
          %s121 = sshll.u32 %s0, 4
          %s122 = int_to_ptr.hbm [resolvable:$true] %s121
          %s123 = sshll.u32 [#allocation3], 4
          %s124 = int_to_ptr.vmem [resolvable:$true] %s123
          %129 = dma.hbm_to_vmem [thread:$0]  %s122, 256, %s124, [#allocation4], 128, 128, 8
        $region16: #{tpu_custom_call.1} parent=11 // pred_fallthru
          _
        // Predicated region
        $region17: #{tpu_custom_call.1} parent=11 // pred_check
          %p130 = pneg %p54
        $region18: #{tpu_custom_call.1} parent=11 // pred_check_branch
          %132 = sbr.rel (%p130) target = $region20
        $region19: #{tpu_custom_call.1} parent=11 // pred_region
          %134 = vsyncadd [#allocation7], 0
          %s135 = sshll.u32 %s1, 4
          %s136 = int_to_ptr.hbm [resolvable:$true] %s135
          %s137 = sshll.u32 [#allocation6], 4
          %s138 = int_to_ptr.vmem [resolvable:$true] %s137
          %143 = dma.hbm_to_vmem [thread:$0]  %s136, 512, %s138, [#allocation7], 128, 128, 8
        $region20: #{tpu_custom_call.1} parent=11 // pred_fallthru
          _
      $region12: #{tpu_custom_call.1} parent=5 // pred_fallthru
        _
      %p144 = scmp.lt.s32.totalorder %s12, 3
      // Predicated region
      $region21: #{tpu_custom_call.1} parent=5 // pred_check
        %p145 = pneg %p144
      $region22: #{tpu_custom_call.1} parent=5 // pred_check_branch
        %147 = sbr.rel (%p145) target = $region24
      $region23: #{tpu_custom_call.1} parent=5 // pred_region
        // Predicated region
        $region25: #{tpu_custom_call.1} parent=23 // pred_check
          %p148 = pneg %p74
        $region26: #{tpu_custom_call.1} parent=23 // pred_check_branch
          %150 = sbr.rel (%p148) target = $region28
        $region27: #{tpu_custom_call.1} parent=23 // pred_region
          %s151 = sand.u32 %s12, 1
          %s152 = scalar_lea.sflag [#allocation4], %s151
          %s153 = sand.u32 %s64, 1
          %s154 = smul.addr %s153, 128
          %s155 = scalar_lea.vmem [#allocation8], %s154
          %157 = vsyncadd %s152, 0
          %s158 = smul.addr %s12, 16
          %s159 = smul.addr %s158, 8
          %s160 = scalar_lea.hbm %s2, %s159
          %s161 = sshll.u32 %s160, 4
          %s162 = int_to_ptr.hbm [resolvable:$true] %s161
          %s163 = sshll.u32 %s155, 4
          %s164 = int_to_ptr.vmem [resolvable:$true] %s163
          %169 = dma.hbm_to_vmem [thread:$0]  %s162, 2048, %s164, %s152, 128, 128, 8
        $region28: #{tpu_custom_call.1} parent=23 // pred_fallthru
          _
      $region24: #{tpu_custom_call.1} parent=5 // pred_fallthru
        _
      %p170 = scmp.le.s32.totalorder 1, %s12
      %p171 = scmp.lt.s32.totalorder %s12, 4
      %p172 = pnand %p170, %p171
      %p173 = pneg %p172
      // Predicated region
      $region29: #{tpu_custom_call.1} parent=5 // pred_check
        _
      $region30: #{tpu_custom_call.1} parent=5 // pred_check_branch
        %175 = sbr.rel (%p172) target = $region32
      $region31: #{tpu_custom_call.1} parent=5 // pred_region
        %s176 = ssub.s32 %s12, 1
        // Predicated region
        $region33: #{tpu_custom_call.1} parent=31 // pred_check
          %p177 = pneg %p33
        $region34: #{tpu_custom_call.1} parent=31 // pred_check_branch
          %179 = sbr.rel (%p177) target = $region36
        $region35: #{tpu_custom_call.1} parent=31 // pred_region
          %181 = dma.done [#allocation4], 256
        $region36: #{tpu_custom_call.1} parent=31 // pred_fallthru
          _
        // Predicated region
        $region37: #{tpu_custom_call.1} parent=31 // pred_check
          %p182 = pneg %p54
        $region38: #{tpu_custom_call.1} parent=31 // pred_check_branch
          %184 = sbr.rel (%p182) target = $region40
        $region39: #{tpu_custom_call.1} parent=31 // pred_region
          %186 = dma.done [#allocation7], 512
        $region40: #{tpu_custom_call.1} parent=31 // pred_fallthru
          _
        %s187 = sand.u32 %s17, 1
        %s188 = scalar_lea.sflag [#allocation4], %s187
        %s189 = sand.u32 %s67, 1
        %s190 = smul.addr %s189, 128
        %s191 = scalar_lea.vmem [#allocation8], %s190
        // Predicated region
        $region41: #{tpu_custom_call.1} parent=31 // pred_check
          %p192 = pneg %p80
        $region42: #{tpu_custom_call.1} parent=31 // pred_check_branch
          %194 = sbr.rel (%p192) target = $region44
        $region43: #{tpu_custom_call.1} parent=31 // pred_region
          %196 = dma.done %s188, 2048
        $region44: #{tpu_custom_call.1} parent=31 // pred_fallthru
          _
        %p197 = pneg %p33
        %p198 = pneg %p30
        %p199 = pneg %p54
        %p200 = pneg %p51
        %s201 = sand.u32 %s17, 1
        %s202 = scalar_lea.sflag [#allocation4], %s201
        %s203 = sand.u32 %s67, 1
        %s204 = smul.addr %s203, 128
        %s205 = scalar_lea.vmem [#allocation8], %s204
        %p206 = pneg %p80
        %p207 = pneg %p77
        %p208 = pneg %p101
        %p209 = pneg %p98
        %p210 = scmp.eq.s32.totalorder %s17, 0
        // Predicated region
        $region45: #{tpu_custom_call.1} parent=31 // pred_check
          %p211 = pneg %p210
        $region46: #{tpu_custom_call.1} parent=31 // pred_check_branch
          %213 = sbr.rel (%p211) target = $region48
        $region47: #{tpu_custom_call.1} parent=31 // pred_region
          %v214 = vld [vmem:[#allocation6] sm:$0xff]
          %v215 = vld [vmem:[#allocation6 + $0x8] sm:$0xff]
          %v216 = vld [vmem:[#allocation6 + $0x10] sm:$0xff]
          %v217 = vld [vmem:[#allocation6 + $0x18] sm:$0xff]
          %218 = vst [vmem:[#allocation2] sm:$0xff] %v214
          %219 = vst [vmem:[#allocation2 + $0x8] sm:$0xff] %v215
          %220 = vst [vmem:[#allocation2 + $0x10] sm:$0xff] %v216
          %221 = vst [vmem:[#allocation2 + $0x18] sm:$0xff] %v217
          %222 = vst [vmem:[#allocation9] sm:$0xff] 0.0
          %223 = vst [vmem:[#allocation9 + $0x8] sm:$0xff] 0.0
          %224 = vst [vmem:[#allocation9 + $0x10] sm:$0xff] 0.0
          %225 = vst [vmem:[#allocation9 + $0x18] sm:$0xff] 0.0
        $region48: #{tpu_custom_call.1} parent=31 // pred_fallthru
          _
        %p226 = scmp.gt.s32.totalorder %s17, 0
        // Predicated region
        $region49: #{tpu_custom_call.1} parent=31 // pred_check
          %p227 = pneg %p226
        $region50: #{tpu_custom_call.1} parent=31 // pred_check_branch
          %229 = sbr.rel (%p227) target = $region52
        $region51: #{tpu_custom_call.1} parent=31 // pred_region
          %v230 = vld [vmem:[#allocation3] sm:$0xff]
          %v231 = vld [vmem:[#allocation3 + $0x8] sm:$0xff]
          %v232 = vld [vmem:[#allocation2] sm:$0xff]
          %v233 = vld [vmem:[#allocation2 + $0x8] sm:$0xff]
          %vm234 = vcmask 130048
          %v236 = vsel %vm234, %v230, 0
          %v239 = vsel %vm234, %v231, 0
          %241 = vmatpush.msra.mxu0 0.0
          %242 = vmatpush.msra.mxu0 0.0
          %243 = vmatpush.msra.mxu0 0.0
          %244 = vmatpush.msra.mxu0 0.0
          %245 = vmatpush.msra.mxu0 0.0
          %246 = vmatpush.msra.mxu0 0.0
          %247 = vmatpush.msra.mxu0 0.0
          %248 = vmatpush.msra.mxu0 0.0
          %249 = vmatpush.msra.mxu0 0.0
          %250 = vmatpush.msra.mxu0 0.0
          %251 = vmatpush.msra.mxu0 0.0
          %252 = vmatpush.msra.mxu0 0.0
          %253 = vmatpush.msra.mxu0 0.0
          %254 = vmatpush.msra.mxu0 0.0
          %255 = vmatpush.msra.mxu0 %v233
          %256 = vmatpush.msra.mxu0 %v232
          %257 = vmatmul.f32.gmra.mxu0 %v236
          %v258 = vpop.f32.mrf.mxu0
          %v259 = vadd.f32 0.0, %v258
          %260 = vmatmul.f32.gmra.mxu0 %v239
          %v261 = vpop.f32.mrf.mxu0
          %v262 = vadd.f32 0.0, %v261
          %263 = vdwg.mxu0
          %264 = vst [vmem:[#allocation2] sm:$0xff] %v259
          %265 = vst [vmem:[#allocation2 + $0x8] sm:$0xff] %v262
          %s266 = scalar_lea.vmem [#allocation2], 16
          %v267 = vld [vmem:[%s266] sm:$0xff]
          %v268 = vld [vmem:[%s266 + $0x8] sm:$0xff]
          %269 = vmatpush.msra.mxu0 0.0
          %270 = vmatpush.msra.mxu0 0.0
          %271 = vmatpush.msra.mxu0 0.0
          %272 = vmatpush.msra.mxu0 0.0
          %273 = vmatpush.msra.mxu0 0.0
          %274 = vmatpush.msra.mxu0 0.0
          %275 = vmatpush.msra.mxu0 0.0
          %276 = vmatpush.msra.mxu0 0.0
          %277 = vmatpush.msra.mxu0 0.0
          %278 = vmatpush.msra.mxu0 0.0
          %279 = vmatpush.msra.mxu0 0.0
          %280 = vmatpush.msra.mxu0 0.0
          %281 = vmatpush.msra.mxu0 0.0
          %282 = vmatpush.msra.mxu0 0.0
          %283 = vmatpush.msra.mxu0 %v268
          %284 = vmatpush.msra.mxu0 %v267
          %285 = vmatmul.f32.gmra.mxu0 %v236
          %v286 = vpop.f32.mrf.mxu0
          %v287 = vadd.f32 0.0, %v286
          %288 = vmatmul.f32.gmra.mxu0 %v239
          %v289 = vpop.f32.mrf.mxu0
          %v290 = vadd.f32 0.0, %v289
          %291 = vdwg.mxu0
          %292 = vst [vmem:[%s266] sm:$0xff] %v287
          %293 = vst [vmem:[%s266 + $0x8] sm:$0xff] %v290
        $region52: #{tpu_custom_call.1} parent=31 // pred_fallthru
          _
        %v294 = vld [vmem:[%s191] sm:$0xff]
        %v295 = vld [vmem:[%s191 + $0x8] sm:$0xff]
        %v296 = vld [vmem:[%s191 + $0x10] sm:$0xff]
        %v297 = vld [vmem:[%s191 + $0x18] sm:$0xff]
        %v298 = vld [vmem:[%s191 + $0x20] sm:$0xff]
        %v299 = vld [vmem:[%s191 + $0x28] sm:$0xff]
        %v300 = vld [vmem:[%s191 + $0x30] sm:$0xff]
        %v301 = vld [vmem:[%s191 + $0x38] sm:$0xff]
        %v302 = vld [vmem:[%s191 + $0x40] sm:$0xff]
        %v303 = vld [vmem:[%s191 + $0x48] sm:$0xff]
        %v304 = vld [vmem:[%s191 + $0x50] sm:$0xff]
        %v305 = vld [vmem:[%s191 + $0x58] sm:$0xff]
        %v306 = vld [vmem:[%s191 + $0x60] sm:$0xff]
        %v307 = vld [vmem:[%s191 + $0x68] sm:$0xff]
        %v308 = vld [vmem:[%s191 + $0x70] sm:$0xff]
        %v309 = vld [vmem:[%s191 + $0x78] sm:$0xff]
        %v310 = vld [vmem:[#allocation2] sm:$0xff]
        %v311 = vld [vmem:[#allocation2 + $0x8] sm:$0xff]
        %312 = vmatpush.msra.mxu0 %v309
        %313 = vmatpush.msra.mxu0 %v308
        %314 = vmatpush.msra.mxu0 %v307
        %315 = vmatpush.msra.mxu0 %v306
        %316 = vmatpush.msra.mxu0 %v305
        %317 = vmatpush.msra.mxu0 %v304
        %318 = vmatpush.msra.mxu0 %v303
        %319 = vmatpush.msra.mxu0 %v302
        %320 = vmatpush.msra.mxu0 %v301
        %321 = vmatpush.msra.mxu0 %v300
        %322 = vmatpush.msra.mxu0 %v299
        %323 = vmatpush.msra.mxu0 %v298
        %324 = vmatpush.msra.mxu0 %v297
        %325 = vmatpush.msra.mxu0 %v296
        %326 = vmatpush.msra.mxu0 %v295
        %327 = vmatpush.msra.mxu0 %v294
        %328 = vmatmul.f32.gmra.mxu0 %v310
        %v329 = vpop.f32.mrf.mxu0
        %v330 = vadd.f32 0.0, %v329
        %331 = vmatmul.f32.gmra.mxu0 %v311
        %v332 = vpop.f32.mrf.mxu0
        %v333 = vadd.f32 0.0, %v332
        %334 = vdwg.mxu0
        %v335 = vld [vmem:[#allocation9] sm:$0xff]
        %v336 = vld [vmem:[#allocation9 + $0x8] sm:$0xff]
        %v337 = vadd.f32 %v335, %v330
        %v338 = vadd.f32 %v336, %v333
        %339 = vst [vmem:[#allocation9] sm:$0xff] %v337
        %340 = vst [vmem:[#allocation9 + $0x8] sm:$0xff] %v338
        %s341 = scalar_lea.vmem [#allocation2], 16
        %v342 = vld [vmem:[%s341] sm:$0xff]
        %v343 = vld [vmem:[%s341 + $0x8] sm:$0xff]
        %344 = vmatpush.msra.mxu0 %v309
        %345 = vmatpush.msra.mxu0 %v308
        %346 = vmatpush.msra.mxu0 %v307
        %347 = vmatpush.msra.mxu0 %v306
        %348 = vmatpush.msra.mxu0 %v305
        %349 = vmatpush.msra.mxu0 %v304
        %350 = vmatpush.msra.mxu0 %v303
        %351 = vmatpush.msra.mxu0 %v302
        %352 = vmatpush.msra.mxu0 %v301
        %353 = vmatpush.msra.mxu0 %v300
        %354 = vmatpush.msra.mxu0 %v299
        %355 = vmatpush.msra.mxu0 %v298
        %356 = vmatpush.msra.mxu0 %v297
        %357 = vmatpush.msra.mxu0 %v296
        %358 = vmatpush.msra.mxu0 %v295
        %359 = vmatpush.msra.mxu0 %v294
        %360 = vmatmul.f32.gmra.mxu0 %v342
        %v361 = vpop.f32.mrf.mxu0
        %v362 = vadd.f32 0.0, %v361
        %363 = vmatmul.f32.gmra.mxu0 %v343
        %v364 = vpop.f32.mrf.mxu0
        %v365 = vadd.f32 0.0, %v364
        %366 = vdwg.mxu0
        %s367 = scalar_lea.vmem [#allocation9], 16
        %v368 = vld [vmem:[%s367] sm:$0xff]
        %v369 = vld [vmem:[%s367 + $0x8] sm:$0xff]
        %v370 = vadd.f32 %v368, %v362
        %v371 = vadd.f32 %v369, %v365
        %372 = vst [vmem:[%s367] sm:$0xff] %v370
        %373 = vst [vmem:[%s367 + $0x8] sm:$0xff] %v371
        %p374 = scmp.eq.s32.totalorder %s17, 2
        // Predicated region
        $region53: #{tpu_custom_call.1} parent=31 // pred_check
          %p375 = pneg %p374
        $region54: #{tpu_custom_call.1} parent=31 // pred_check_branch
          %377 = sbr.rel (%p375) target = $region56
        $region55: #{tpu_custom_call.1} parent=31 // pred_region
          %v378 = vld [vmem:[#allocation9] sm:$0xff]
          %v379 = vld [vmem:[#allocation9 + $0x8] sm:$0xff]
          %v380 = vld [vmem:[#allocation9 + $0x10] sm:$0xff]
          %v381 = vld [vmem:[#allocation9 + $0x18] sm:$0xff]
          %v382 = vmax.f32 %v378, 0.0
          %v383 = vmax.f32 %v379, 0.0
          %v384 = vmax.f32 %v380, 0.0
          %v385 = vmax.f32 %v381, 0.0
          %386 = vst [vmem:[#allocation9] sm:$0xff] %v382
          %387 = vst [vmem:[#allocation9 + $0x8] sm:$0xff] %v383
          %388 = vst [vmem:[#allocation9 + $0x10] sm:$0xff] %v384
          %389 = vst [vmem:[#allocation9 + $0x18] sm:$0xff] %v385
        $region56: #{tpu_custom_call.1} parent=31 // pred_fallthru
          _
        // Predicated region
        $region57: #{tpu_custom_call.1} parent=31 // pred_check
          %p390 = pneg %p98
        $region58: #{tpu_custom_call.1} parent=31 // pred_check_branch
          %392 = sbr.rel (%p390) target = $region60
        $region59: #{tpu_custom_call.1} parent=31 // pred_region
          %394 = vsyncadd [#allocation5], 0
          %s395 = sshll.u32 [#allocation9], 4
          %s396 = int_to_ptr.vmem [resolvable:$true] %s395
          %s397 = sshll.u32 %s3, 4
          %s398 = int_to_ptr.hbm [resolvable:$true] %s397
          %403 = dma.vmem_to_hbm [thread:$0]  %s396, 512, %s398, [#allocation5], 128, 128, 8
        $region60: #{tpu_custom_call.1} parent=31 // pred_fallthru
          _
        // Predicated region
        $region61: #{tpu_custom_call.1} parent=31 // pred_check
          %p404 = pneg %p98
        $region62: #{tpu_custom_call.1} parent=31 // pred_check_branch
          %406 = sbr.rel (%p404) target = $region64
        $region63: #{tpu_custom_call.1} parent=31 // pred_region
          %408 = dma.done [#allocation5], 512
        $region64: #{tpu_custom_call.1} parent=31 // pred_fallthru
          _
      $region32: #{tpu_custom_call.1} parent=5 // pred_fallthru
        _
      %p409 = scmp.le.s32.totalorder 2, %s12
      // Predicated region
      $region65: #{tpu_custom_call.1} parent=5 // pred_check
        %p410 = pneg %p409
      $region66: #{tpu_custom_call.1} parent=5 // pred_check_branch
        %412 = sbr.rel (%p410) target = $region68
      $region67: #{tpu_custom_call.1} parent=5 // pred_region
        %s413 = ssub.s32 %s12, 2
      $region68: #{tpu_custom_call.1} parent=5 // pred_fallthru
        _
    $region6: #{tpu_custom_call.1} parent=1 // loop_footer
      %s16 = sadd.s32 1, %s12
    $region7: #{tpu_custom_call.1} parent=1 // loop_footer_branch
      %11 = sbr.rel target = $region3
    $region8: #{tpu_custom_call.1} parent=1 // loop_exit
      _
    %414 = vsyncpa [#allocation4], 1
    %s415 = scalar_lea.sflag [#allocation4], 1
    %416 = vsyncpa %s415, 1
    %417 = vsyncpa [#allocation7], 1
    %418 = vsyncpa [#allocation5], 1
    %s419 = scalar_lea.sflag [#allocation5], 1
    %420 = vsyncpa %s419, 1

</llo_original>
